<compile_context>
chip_gen: v6e
topology: v6e:2x2x1
jax: 0.10.0
libtpu: 0.0.40
codegen_flags: <defaults>
</compile_context>

<pallas_src>
import functools

import jax
import jax.numpy as jnp
from jax.experimental import pallas as pl
from jax.experimental.pallas import tpu as pltpu


# ----------------------------------------------------------------------------
# Pallas kernel
# ----------------------------------------------------------------------------
def _rope_kernel(pos_ref, inv_ref, cos_ref, sin_ref, *, scaling):
    # pos_ref : (1, TS, 1) int32   -- positions, sublane-major
    # inv_ref : (1, D)     float32 -- inverse freqs already duplicated to width D
    # cos_ref : (1, TS, D) out dtype
    # sin_ref : (1, TS, D) out dtype
    pos = pos_ref[0].astype(jnp.float32)          # (TS, 1) int->f32 in kernel
    inv = inv_ref[...]                            # (1, D)
    freqs = pos * inv                             # (TS, D) pure VPU broadcast

    cos_v = jnp.cos(freqs)
    sin_v = jnp.sin(freqs)
    if scaling != 1.0:                            # trace-time guard
        cos_v = cos_v * scaling
        sin_v = sin_v * scaling

    # Single full-width stores (no masked half-lane writes, no lane shifts).
    cos_ref[0, :, :] = cos_v.astype(cos_ref.dtype)
    sin_ref[0, :, :] = sin_v.astype(sin_ref.dtype)


# ----------------------------------------------------------------------------
# Tiling / VMEM helpers
# ----------------------------------------------------------------------------
def _choose_seq_tile(S, B, max_tile):
    """Sequence tile: multiple of 8 (or full extent for small S).

    When B == 1 the tile is capped to ~S/2 so the grid has >= 2 sequence
    tiles and can be split across the two TensorCores on v7x.
    """
    if S <= 256:
        return S                                  # full-extent block is always legal
    target = min(max_tile, S)
    if B == 1:
        target = min(target, pl.cdiv(S, 2))
    return max((target // 8) * 8, 8)


def _vmem_limit_bytes(TS, D, out_dtype):
    """Scoped-VMEM limit derived from the actual tile footprint (+ headroom)."""
    osize = jnp.dtype(out_dtype).itemsize
    d_pad = pl.cdiv(D, 128) * 128                 # lane padding in VMEM
    out_bytes = 2 * 2 * TS * d_pad * osize        # cos + sin, double-buffered
    pos_bytes = 2 * TS * 128 * 4                  # (TS,1) int32 padded to 128 lanes
    inv_bytes = 2 * 8 * d_pad * 4
    needed = out_bytes + pos_bytes + inv_bytes + (2 << 20)   # headroom
    return int(min(max(needed, 16 << 20), 64 << 20))


# ----------------------------------------------------------------------------
# Wrapper
# ----------------------------------------------------------------------------
def llama_rotary_embedding(x, position_ids, inv_freq, attention_scaling=1.0,
                           *, max_seq_tile=4096, shared_positions=False):
    """Returns (cos, sin) with shape (B, S, head_dim) and dtype x.dtype.

    If shared_positions=True and B > 1 (all rows of position_ids identical,
    i.e. the standard arange case), the returned tensors have shape
    (1, S, head_dim) and are meant to broadcast lazily against (B, ...) in
    the consumer — materialising the broadcast would cancel the saving.
    """
    if not isinstance(attention_scaling, (bool,)) and isinstance(attention_scaling, (int, float)):
        scaling = float(attention_scaling)
    else:
        raise TypeError("attention_scaling must be a static Python scalar")

    B, S = position_ids.shape
    D2 = inv_freq.shape[0]
    D = 2 * D2
    out_dtype = x.dtype

    if shared_positions and B > 1:
        return llama_rotary_embedding(
            x, position_ids[:1], inv_freq, scaling,
            max_seq_tile=max_seq_tile, shared_positions=False)

    TS = _choose_seq_tile(S, B, max_seq_tile)
    n_seq = pl.cdiv(S, TS)                        # padded tail block if TS ∤ S

    # Metadata-only reshapes; positions stay int32.
    pos = position_ids.astype(jnp.int32).reshape(B, S, 1)        # sublane-major
    inv_full = jnp.concatenate(
        [inv_freq.astype(jnp.float32)] * 2, axis=0).reshape(1, D)  # width D

    kernel = functools.partial(_rope_kernel, scaling=scaling)

    cos, sin = pl.pallas_call(
        kernel,
        out_shape=(
            jax.ShapeDtypeStruct((B, S, D), out_dtype),
            jax.ShapeDtypeStruct((B, S, D), out_dtype),
        ),
        grid=(B, n_seq),
        in_specs=[
            pl.BlockSpec((1, TS, 1), lambda b, s: (b, s, 0)),     # positions tile
            pl.BlockSpec((1, D), lambda b, s: (0, 0)),            # shared inv_freq
        ],
        out_specs=(
            pl.BlockSpec((1, TS, D), lambda b, s: (b, s, 0)),
            pl.BlockSpec((1, TS, D), lambda b, s: (b, s, 0)),
        ),
        compiler_params=pltpu.CompilerParams(
            dimension_semantics=("parallel", "parallel"),
            vmem_limit_bytes=_vmem_limit_bytes(TS, D, out_dtype),
        ),
    )(pos, inv_full)

    return cos, sin


def default_rope_init(head_dim, base=10000.0):
    """ROPE_INIT_FUNCTIONS['default']: inv_freq + attention_scaling."""
    inv_freq = 1.0 / (
        base ** (jnp.arange(0, head_dim, 2, dtype=jnp.float32) / head_dim)
    )
    attention_scaling = 1.0
    return inv_freq, attention_scaling


# ----------------------------------------------------------------------------
# Reference (pure JAX) for verification
# ----------------------------------------------------------------------------
def _reference(x, position_ids, inv_freq, attention_scaling):
    pos = position_ids.astype(jnp.float32)                     # (B, S)
    freqs = pos[:, :, None] * inv_freq[None, None, :]          # (B, S, D2)
    emb = jnp.concatenate([freqs, freqs], axis=-1)             # (B, S, D)
    cos = jnp.cos(emb) * attention_scaling
    sin = jnp.sin(emb) * attention_scaling
    return cos.astype(x.dtype), sin.astype(x.dtype)


if __name__ == "__main__":
    key = jax.random.PRNGKey(0)

    # --- Test 1: small config from the module --------------------------------
    #   hidden_size=32, num_attention_heads=2 -> head_dim=16, rope base=10000
    B, S, hidden, n_heads = 2, 8, 32, 2
    head_dim = hidden // n_heads
    x = jax.random.normal(key, (B, S, hidden), dtype=jnp.float32)  # only dtype used
    position_ids = jnp.broadcast_to(
        jnp.arange(S, dtype=jnp.int32)[None, :], (B, S))
    inv_freq, attention_scaling = default_rope_init(head_dim)

    cos, sin = llama_rotary_embedding(x, position_ids, inv_freq, attention_scaling)
    jax.block_until_ready((cos, sin))
    cos_ref, sin_ref = _reference(x, position_ids, inv_freq, attention_scaling)
    assert cos.shape == (B, S, head_dim) and sin.shape == (B, S, head_dim)
    assert cos.dtype == x.dtype and sin.dtype == x.dtype
    assert jnp.allclose(cos, cos_ref, atol=1e-5, rtol=1e-5)
    assert jnp.allclose(sin, sin_ref, atol=1e-5, rtol=1e-5)

    # --- Test 2: head_dim=128 (lane-dense outputs), bf16, non-trivial scaling -
    B2, S2, hd2 = 2, 512, 128
    x2 = jax.random.normal(jax.random.PRNGKey(1), (B2, S2, 2 * hd2),
                           dtype=jnp.bfloat16)
    pos2 = jnp.broadcast_to(jnp.arange(S2, dtype=jnp.int32)[None, :], (B2, S2))
    inv2, _ = default_rope_init(hd2)
    cos2, sin2 = llama_rotary_embedding(x2, pos2, inv2, 0.5)
    jax.block_until_ready((cos2, sin2))
    cos2_ref, sin2_ref = _reference(x2, pos2, inv2, 0.5)
    assert cos2.dtype == jnp.bfloat16 and sin2.dtype == jnp.bfloat16
    assert jnp.allclose(cos2.astype(jnp.float32), cos2_ref.astype(jnp.float32),
                        atol=1e-2)
    assert jnp.allclose(sin2.astype(jnp.float32), sin2_ref.astype(jnp.float32),
                        atol=1e-2)

    # --- Test 3: B=1 with irregular S -> cdiv grid, padded tail, >=2 seq tiles
    B3, S3, hd3 = 1, 520, 64
    x3 = jax.random.normal(jax.random.PRNGKey(2), (B3, S3, 2 * hd3),
                           dtype=jnp.float32)
    pos3 = jnp.arange(S3, dtype=jnp.int32)[None, :]
    inv3, _ = default_rope_init(hd3)
    cos3, sin3 = llama_rotary_embedding(x3, pos3, inv3, 1.0)
    jax.block_until_ready((cos3, sin3))
    cos3_ref, sin3_ref = _reference(x3, pos3, inv3, 1.0)
    assert cos3.shape == (B3, S3, hd3)
    assert jnp.allclose(cos3, cos3_ref, atol=1e-5, rtol=1e-5)
    assert jnp.allclose(sin3, sin3_ref, atol=1e-5, rtol=1e-5)

    # --- Test 4: shared_positions fast path (returns un-broadcast (1, S, D)) --
    cos4, sin4 = llama_rotary_embedding(x2, pos2, inv2, 0.5,
                                        shared_positions=True)
    jax.block_until_ready((cos4, sin4))
    assert cos4.shape == (1, S2, hd2) and sin4.shape == (1, S2, hd2)
    assert jnp.allclose(cos4.astype(jnp.float32),
                        cos2_ref[:1].astype(jnp.float32), atol=1e-2)
    assert jnp.allclose(sin4.astype(jnp.float32),
                        sin2_ref[:1].astype(jnp.float32), atol=1e-2)

    print("KERNEL_OK")
</pallas_src>

<mosaic_0001>
module attributes {stable_mosaic.version = 11 : i64} {
  func.func @_rope_kernel(%arg0: i32, %arg1: i32, %arg2: memref<1x8x1xi32, #tpu.memory_space<vmem>>, %arg3: memref<1x16xf32, #tpu.memory_space<vmem>>, %arg4: memref<1x8x16xf32, #tpu.memory_space<vmem>>, %arg5: memref<1x8x16xf32, #tpu.memory_space<vmem>>) attributes {dimension_semantics = [#tpu.dimension_semantics<parallel>, #tpu.dimension_semantics<parallel>], iteration_bounds = array<i64: 2, 1>, scalar_prefetch = 0 : i64, scratch_operands = 0 : i64, tpu.core_type = #tpu.core_type<tc>, window_params = [{transform_indices = @transform_0, window_bounds = array<i64: 1, 8, 1>}, {pipeline_mode = #tpu.pipeline_mode<synchronous>, transform_indices = @transform_1, window_bounds = array<i64: 1, 16>}, {transform_indices = @transform_2, window_bounds = array<i64: 1, 8, 16>}, {transform_indices = @transform_3, window_bounds = array<i64: 1, 8, 16>}]} {
    %c0 = arith.constant 0 : index
    %c0_0 = arith.constant 0 : index
    %c0_1 = arith.constant 0 : index
    %0 = vector.load %arg2[%c0, %c0_0, %c0_1] : memref<1x8x1xi32, #tpu.memory_space<vmem>>, vector<1x8x1xi32>
    %1 = vector.shape_cast %0 : vector<1x8x1xi32> to vector<8x1xi32>
    %2 = arith.sitofp %1 : vector<8x1xi32> to vector<8x1xf32>
    %c0_2 = arith.constant 0 : index
    %c0_3 = arith.constant 0 : index
    %3 = vector.load %arg3[%c0_2, %c0_3] : memref<1x16xf32, #tpu.memory_space<vmem>>, vector<1x16xf32>
    %4 = vector.broadcast %2 : vector<8x1xf32> to vector<8x16xf32>
    %5 = vector.broadcast %3 : vector<1x16xf32> to vector<8x16xf32>
    %6 = arith.mulf %4, %5 : vector<8x16xf32>
    %7 = math.cos %6 : vector<8x16xf32>
    %8 = math.sin %6 : vector<8x16xf32>
    %c0_4 = arith.constant 0 : index
    %c0_5 = arith.constant 0 : index
    %c0_6 = arith.constant 0 : index
    %9 = vector.load %arg4[%c0_4, %c0_5, %c0_6] : memref<1x8x16xf32, #tpu.memory_space<vmem>>, vector<1x8x16xf32>
    %10 = vector.shape_cast %9 : vector<1x8x16xf32> to vector<8x16xf32>
    %11 = vector.shape_cast %7 : vector<8x16xf32> to vector<1x8x16xf32>
    tpu.vector_store %arg4[%c0_4, %c0_5, %c0_6], %11 {strides = array<i32>} : memref<1x8x16xf32, #tpu.memory_space<vmem>>, vector<1x8x16xf32>,
    %c0_7 = arith.constant 0 : index
    %c0_8 = arith.constant 0 : index
    %c0_9 = arith.constant 0 : index
    %12 = vector.load %arg5[%c0_7, %c0_8, %c0_9] : memref<1x8x16xf32, #tpu.memory_space<vmem>>, vector<1x8x16xf32>
    %13 = vector.shape_cast %12 : vector<1x8x16xf32> to vector<8x16xf32>
    %14 = vector.shape_cast %8 : vector<8x16xf32> to vector<1x8x16xf32>
    tpu.vector_store %arg5[%c0_7, %c0_8, %c0_9], %14 {strides = array<i32>} : memref<1x8x16xf32, #tpu.memory_space<vmem>>, vector<1x8x16xf32>,
    return
  }
  func.func @transform_0(%arg0: i32, %arg1: i32) -> (i32, i32, i32) {
    %c0_i32 = arith.constant 0 : i32
    %c0_i32_0 = arith.constant 0 : i32
    return %arg0, %arg1, %c0_i32 : i32, i32, i32
  }
  func.func @transform_1(%arg0: i32, %arg1: i32) -> (i32, i32) {
    %c0_i32 = arith.constant 0 : i32
    %c0_i32_0 = arith.constant 0 : i32
    %c0_i32_1 = arith.constant 0 : i32
    return %c0_i32, %c0_i32_0 : i32, i32
  }
  func.func @transform_2(%arg0: i32, %arg1: i32) -> (i32, i32, i32) {
    %c0_i32 = arith.constant 0 : i32
    %c0_i32_0 = arith.constant 0 : i32
    return %arg0, %arg1, %c0_i32 : i32, i32, i32
  }
  func.func @transform_3(%arg0: i32, %arg1: i32) -> (i32, i32, i32) {
    %c0_i32 = arith.constant 0 : i32
    %c0_i32_0 = arith.constant 0 : i32
    return %arg0, %arg1, %c0_i32 : i32, i32, i32
  }
}

</mosaic_0001>

<llo_original>
// kernel: tpu_custom_call.1
$region0: #{tpu_custom_call.1}
  #allocation0 [shape = 'u32[]', space=smem, size = 0x4, offset = 0x4, fixed_abs, tag = 'smem constant byte address 0x4 - core index']
  #allocation1 [shape = 'u32[144,128]{1,0:T(1,128)}', space=vmem, size = 0x12000, scoped, tag = 'internal scratch']
  %s0 = inlined_call_operand.vmem [shape: s32[2,8,1], index: 0, kind: input, shape index: {}]
  %s1 = inlined_call_operand.vmem [shape: f32[1,16], index: 1, kind: input, shape index: {}]
  %s2 = inlined_call_operand.hbm [shape: f32[2,8,16], index: 2, kind: output, shape index: {0}]
  %s3 = inlined_call_operand.hbm [shape: f32[2,8,16], index: 3, kind: output, shape index: {1}]
  %4 = xla_tuple %s2, %s3
  %s5 = sld [smem:[#allocation0]]
  $region49: #{tpu_custom_call.1} parent=0
    _
  %s7 = ssub.s32 1, %s5
  %s8 = scalar_select 0, %s7, %s5
  $region1: #{tpu_custom_call.1} parent=0
    #allocation2 [shape = 'u8[8192]{0}', space=vmem, size = 0x2000, scoped, tag = 'output window, operand 0']
    #allocation3 [shape = 's32[2]{0}', space=sflag, size = 0x8, scoped, tag = 'scoped memory for tpu_custom_call.1']
    #allocation4 [shape = 'u8[8192]{0}', space=vmem, size = 0x2000, scoped, tag = 'output window, operand 1']
    #allocation5 [shape = 's32[2]{0}', space=sflag, size = 0x8, scoped, tag = 'scoped memory for tpu_custom_call.1']
    %9 = vsyncpa [#allocation3], 0
    %s10 = scalar_lea.sflag [#allocation3], 1
    %11 = vsyncpa %s10, 0
    %12 = vsyncpa [#allocation5], 0
    %s13 = scalar_lea.sflag [#allocation5], 1
    %14 = vsyncpa %s13, 0
    loop: start=0, step=1, limit=4
    $region2: #{tpu_custom_call.1} parent=1 // loop_pre_header
      _
    $region3: #{tpu_custom_call.1} parent=1 // loop_header
      %s16 = sphi 0, %s20
      %p17 = scmp.ge.s32.totalorder %s16, 4
      %s23 = sphi 0, %s35
      %s24 = sphi 0, %s31
      %s25 = sphi 0, %s23
      %s26 = sphi 0, %s24
      %s27 = sphi 0, %s25
      %s28 = sphi 0, %s26
      %s40 = sphi 0, %s42
      %s43 = sphi 0, %s40
      %s44 = sphi 0, %s43
      %s60 = sphi 0, %s44
      %s64 = sphi 0, %s64
      %s66 = sphi 0, %s64
      %s67 = sphi 0, %s66
      %s81 = sphi 0, %s67
      %s89 = sphi 0, %s91
      %s92 = sphi 0, %s89
      %s93 = sphi 0, %s92
      %s109 = sphi 0, %s93
      %s117 = sphi 0, %s119
      %s120 = sphi 0, %s117
      %s121 = sphi 0, %s120
      %s137 = sphi 0, %s121
    $region4: #{tpu_custom_call.1} parent=1 // loop_header_branch
      %19 = sbr.rel (%p17) target = $region8
    $region5: #{tpu_custom_call.1} parent=1 // loop_body
      %s21 = ssub.s32 %s16, 1
      %s22 = ssub.s32 %s16, 2
      %s29 = sadd.s32 1, %s24
      %p30 = scmp.ge.s32.totalorder %s29, 1
      %s31 = scalar_select %p30, 0, %s29
      %s32 = sadd.s32 1, %s23
      %s33 = scalar_select %p30, %s32, %s23
      %p34 = scmp.ge.s32.totalorder %s33, 2
      %s35 = scalar_select %p34, 0, %s33
      %s36 = ssub.s32 %s23, %s35
      %s37 = ssub.s32 %s24, %s31
      %s38 = sor.u32 %s36, %s37
      %p39 = scmp.eq.s32.totalorder %s38, 0
      %s41 = sadd.s32 %s40, 1
      %s42 = scalar_select %p39, %s40, %s41
      %p45 = pneg %p39
      %p46 = scmp.eq.s32.totalorder %s16, 1
      %p47 = por %p45, %p46
      %p48 = scmp.ne.s32.totalorder %s40, %s43
      %p49 = scmp.eq.s32.totalorder %s16, 0
      %p50 = por %p48, %p49
      %p51 = scmp.ne.s32.totalorder %s40, %s43
      %p52 = scmp.eq.s32.totalorder %s21, 1
      %p53 = por %p51, %p52
      %p54 = scmp.ne.s32.totalorder %s43, %s44
      %p55 = scmp.eq.s32.totalorder %s21, 0
      %p56 = por %p54, %p55
      %p57 = scmp.ne.s32.totalorder %s43, %s44
      %p58 = scmp.eq.s32.totalorder %s22, 1
      %p59 = por %p57, %p58
      %p61 = scmp.ne.s32.totalorder %s44, %s60
      %p62 = scmp.eq.s32.totalorder %s22, 0
      %p63 = por %p61, %p62
      %s65 = sadd.s32 %s64, 1
      %p68 = scmp.eq.s32.totalorder %s16, 1
      %p69 = scmp.ne.s32.totalorder %s64, %s66
      %p70 = scmp.eq.s32.totalorder %s16, 0
      %p71 = por %p69, %p70
      %p72 = scmp.ne.s32.totalorder %s64, %s66
      %p73 = scmp.eq.s32.totalorder %s21, 1
      %p74 = por %p72, %p73
      %p75 = scmp.ne.s32.totalorder %s66, %s67
      %p76 = scmp.eq.s32.totalorder %s21, 0
      %p77 = por %p75, %p76
      %p78 = scmp.ne.s32.totalorder %s66, %s67
      %p79 = scmp.eq.s32.totalorder %s22, 1
      %p80 = por %p78, %p79
      %p82 = scmp.ne.s32.totalorder %s67, %s81
      %p83 = scmp.eq.s32.totalorder %s22, 0
      %p84 = por %p82, %p83
      %s85 = ssub.s32 %s23, %s35
      %s86 = ssub.s32 %s24, %s31
      %s87 = sor.u32 %s85, %s86
      %p88 = scmp.eq.s32.totalorder %s87, 0
      %s90 = sadd.s32 %s89, 1
      %s91 = scalar_select %p88, %s89, %s90
      %p94 = pneg %p88
      %p95 = scmp.eq.s32.totalorder %s16, 1
      %p96 = por %p94, %p95
      %p97 = scmp.ne.s32.totalorder %s89, %s92
      %p98 = scmp.eq.s32.totalorder %s16, 0
      %p99 = por %p97, %p98
      %p100 = scmp.ne.s32.totalorder %s89, %s92
      %p101 = scmp.eq.s32.totalorder %s21, 1
      %p102 = por %p100, %p101
      %p103 = scmp.ne.s32.totalorder %s92, %s93
      %p104 = scmp.eq.s32.totalorder %s21, 0
      %p105 = por %p103, %p104
      %p106 = scmp.ne.s32.totalorder %s92, %s93
      %p107 = scmp.eq.s32.totalorder %s22, 1
      %p108 = por %p106, %p107
      %p110 = scmp.ne.s32.totalorder %s93, %s109
      %p111 = scmp.eq.s32.totalorder %s22, 0
      %p112 = por %p110, %p111
      %s113 = ssub.s32 %s23, %s35
      %s114 = ssub.s32 %s24, %s31
      %s115 = sor.u32 %s113, %s114
      %p116 = scmp.eq.s32.totalorder %s115, 0
      %s118 = sadd.s32 %s117, 1
      %s119 = scalar_select %p116, %s117, %s118
      %p122 = pneg %p116
      %p123 = scmp.eq.s32.totalorder %s16, 1
      %p124 = por %p122, %p123
      %p125 = scmp.ne.s32.totalorder %s117, %s120
      %p126 = scmp.eq.s32.totalorder %s16, 0
      %p127 = por %p125, %p126
      %p128 = scmp.ne.s32.totalorder %s117, %s120
      %p129 = scmp.eq.s32.totalorder %s21, 1
      %p130 = por %p128, %p129
      %p131 = scmp.ne.s32.totalorder %s120, %s121
      %p132 = scmp.eq.s32.totalorder %s21, 0
      %p133 = por %p131, %p132
      %p134 = scmp.ne.s32.totalorder %s120, %s121
      %p135 = scmp.eq.s32.totalorder %s22, 1
      %p136 = por %p134, %p135
      %p138 = scmp.ne.s32.totalorder %s121, %s137
      %p139 = scmp.eq.s32.totalorder %s22, 0
      %p140 = por %p138, %p139
      %p141 = scmp.le.s32.totalorder 1, %s16
      %p142 = scmp.lt.s32.totalorder %s16, 3
      %p143 = pnand %p141, %p142
      %p144 = pneg %p143
      // Predicated region
      $region9: #{tpu_custom_call.1} parent=5 // pred_check
        _
      $region10: #{tpu_custom_call.1} parent=5 // pred_check_branch
        %146 = sbr.rel (%p143) target = $region12
      $region11: #{tpu_custom_call.1} parent=5 // pred_region
        %s147 = ssub.s32 %s16, 1
        // Predicated region
        $region13: #{tpu_custom_call.1} parent=11 // pred_check
          %p148 = pneg %p77
        $region14: #{tpu_custom_call.1} parent=11 // pred_check_branch
          %150 = sbr.rel (%p148) target = $region16
        $region15: #{tpu_custom_call.1} parent=11 // pred_region
          _
        $region16: #{tpu_custom_call.1} parent=11 // pred_fallthru
          _
      $region12: #{tpu_custom_call.1} parent=5 // pred_fallthru
        _
      %p151 = scmp.lt.s32.totalorder %s16, 2
      // Predicated region
      $region17: #{tpu_custom_call.1} parent=5 // pred_check
        %p152 = pneg %p151
      $region18: #{tpu_custom_call.1} parent=5 // pred_check_branch
        %154 = sbr.rel (%p152) target = $region20
      $region19: #{tpu_custom_call.1} parent=5 // pred_region
        // Predicated region
        $region21: #{tpu_custom_call.1} parent=19 // pred_check
          %p155 = pneg %p50
        $region22: #{tpu_custom_call.1} parent=19 // pred_check_branch
          %157 = sbr.rel (%p155) target = $region24
        $region23: #{tpu_custom_call.1} parent=19 // pred_region
          %p158 = scmp.lt.s32.totalorder %s23, 1
          %s159 = scalar_select %p158, %s23, 1
          %p160 = scmp.lt.s32.totalorder %s24, 0
          %s161 = scalar_select %p160, %s24, 0
          %s162 = sadd.s32 %s161, %s159
          %s163 = smul.addr %s162, 8
          %s164 = scalar_lea.vmem %s0, %s163
        $region24: #{tpu_custom_call.1} parent=19 // pred_fallthru
          _
      $region20: #{tpu_custom_call.1} parent=5 // pred_fallthru
        _
      %p165 = scmp.le.s32.totalorder 1, %s16
      %p166 = scmp.lt.s32.totalorder %s16, 3
      %p167 = pnand %p165, %p166
      %p168 = pneg %p167
      // Predicated region
      $region25: #{tpu_custom_call.1} parent=5 // pred_check
        _
      $region26: #{tpu_custom_call.1} parent=5 // pred_check_branch
        %170 = sbr.rel (%p167) target = $region28
      $region27: #{tpu_custom_call.1} parent=5 // pred_region
        %s171 = ssub.s32 %s16, 1
        %p172 = scmp.lt.s32.totalorder %s25, 1
        %s173 = scalar_select %p172, %s25, 1
        %p174 = scmp.lt.s32.totalorder %s26, 0
        %s175 = scalar_select %p174, %s26, 0
        %s176 = sadd.s32 %s175, %s173
        %s177 = smul.addr %s176, 8
        %s178 = scalar_lea.vmem %s0, %s177
        %p179 = pneg %p56
        %p180 = pneg %p53
        %p181 = pneg %p77
        %p182 = pneg %p74
        %p183 = pneg %p105
        %p184 = pneg %p102
        %s185 = sand.u32 %s92, 1
        %s186 = scalar_lea.sflag [#allocation3], %s185
        %s187 = sand.u32 %s92, 1
        %s188 = smul.addr %s187, 8
        %s189 = scalar_lea.vmem [#allocation2], %s188
        %p190 = pneg %p133
        %p191 = pneg %p130
        %s192 = sand.u32 %s120, 1
        %s193 = scalar_lea.sflag [#allocation5], %s192
        %s194 = sand.u32 %s120, 1
        %s195 = smul.addr %s194, 8
        %s196 = scalar_lea.vmem [#allocation4], %s195
        %p197 = scmp.lt.s32.totalorder %s25, 1
        %s198 = scalar_select %p197, %s25, 1
        %p199 = scmp.lt.s32.totalorder %s26, 0
        %s200 = scalar_select %p199, %s26, 0
        %s201 = sadd.s32 %s200, %s198
        %s202 = smul.addr %s201, 8
        %s203 = scalar_lea.vmem %s0, %s202
        %v204 = vld [vmem:[%s203] sm:$0xff]
        %v205 = vcvt.s32.f32 %v204
        %v206 = vld [vmem:[%s1] sm:$0x1]
        %208 = vset.pattern.permute.xlu0 0
        %209 = vperm.xlu0 %208, %v205
        %v210 = vpop.permute.xlu0 %209
        %v213 = vlaneseq
        %v214 = vshrl.u32 %v213, 7
        %v215 = vsub.s32 0, %v214
        %v216 = vrot.slane %v206, %v215
        %v218 = vmul.f32 %v210, %v216
        %v219 = vand.u32 2147483647, %v218
        %vm220 = vcmp.le.f32.partialorder %v219, 0.7853982
        %vm221 = vcmp.lt.s32.totalorder %v218, 0
        %v222 = vand.u32 %v218, 2139095040
        %v223 = vshrl.u32 %v222, 23
        %v224 = vsub.s32 %v223, 127
        %v225 = vand.u32 2147483647, %v218
        %v226 = vand.u32 %v225, 8388607
        %v227 = vor.u32 %v226, 8388608
        %v228 = vsub.s32 0, %v227
        %v229 = vadd.s32 %v224, 1
        %vm230 = vcmp.gt.s32.totalorder %v229, 0
        %v231 = vsel %vm230, %v229, 0
        %v232 = vshrl.u32 %v231, 5
        %v233 = vand.u32 %v231, 31
        %v234 = vsub.s32 32, %v233
        %v235 = vshrl.u32 683565275, %v234
        %v236 = vshll.u32 683565275, %v233
        %v237 = vshrl.u32 2475754826, %v234
        %v238 = vor.u32 %v236, %v237
        %v239 = vshll.u32 2475754826, %v233
        %v240 = vshrl.u32 2131351028, %v234
        %v241 = vor.u32 %v239, %v240
        %v242 = vshll.u32 2131351028, %v233
        %v243 = vshrl.u32 2102212464, %v234
        %v244 = vor.u32 %v242, %v243
        %v245 = vshll.u32 2102212464, %v233
        %v246 = vshrl.u32 920167782, %v234
        %v247 = vor.u32 %v245, %v246
        %v248 = vshll.u32 920167782, %v233
        %v249 = vshrl.u32 1326507024, %v234
        %v250 = vor.u32 %v248, %v249
        %vm251 = vcmp.lt.s32.totalorder %v232, 1
        %vm252 = vcmp.lt.s32.totalorder %v232, 2
        %vm253 = vcmp.lt.s32.totalorder %v232, 3
        %vm254 = vcmp.lt.s32.totalorder %v232, 4
        %v255 = vsel %vm251, %v235, %v238
        %v256 = vsel %vm254, %v244, 2102212464
        %v257 = vsel %vm253, %v241, %v256
        %v258 = vsel %vm252, %v255, %v257
        %v259 = vsel %vm251, %v238, %v241
        %v260 = vsel %vm254, %v247, 920167782
        %v261 = vsel %vm253, %v244, %v260
        %v262 = vsel %vm252, %v259, %v261
        %v263 = vsel %vm251, %v241, %v244
        %v264 = vsel %vm254, %v250, 1326507024
        %v265 = vsel %vm253, %v247, %v264
        %v266 = vsel %vm252, %v263, %v265
        %v267 = vshll.u32 %v227, 8
        %v268 = vmul.u32.u64.compose %v267, %v266
        %v269 = vextract.low.u32 %v268
        %v270 = vextract.high.u32 %v268
        %v271 = vmul.u32.u64.compose %v267, %v262
        %v272 = vextract.low.u32 %v271
        %v273 = vextract.high.u32 %v271
        %v274 = vmul.u32 %v267, %v258
        %v275 = vadd.s32 %v270, %v272
        %vm276 = vc.u32 %v270, %v272
        %v277 = vadd.s32 %v273, 1
        %v278 = vsel %vm276, %v277, %v273
        %v279 = vadd.s32 %v274, %v278
        %v280 = vadd.s32 %v279, 536870912
        %v281 = vshrl.u32 %v280, 30
        %v282 = vshll.u32 %v281, 30
        %v283 = vsub.s32 %v279, %v282
        %vm284 = vcmp.lt.s32.totalorder %v283, 0
        %v285 = vsub.s32 0, %v283
        %v286 = vsel %vm284, %v285, %v283
        %v287 = vclz %v286
        %v288 = vsub.s32 %v287, 2
        %vm289 = vcmp.gt.s32.totalorder 0, %v288
        %v290 = vsel %vm289, 0, %v288
        %v291 = vsub.s32 32, %v290
        %v292 = vshll.u32 %v283, %v290
        %v293 = vshrl.u32 %v275, %v291
        %v294 = vor.u32 %v292, %v293
        %v295 = vsub.s32 4294967266, %v290
        %v296 = vadd.s32 %v295, 127
        %v297 = vshll.u32 %v296, 23
        %v298 = vor.u32 4788187, %v297
        %v299 = vand.u32 2147483647, %v298
        %v301 = vcvt.s32.f32 %v294
        %v302 = vmul.f32 %v301, %v299
        %v303 = vxor.u32 %v302, 2147483648
        %v304 = vsel %vm221, %v303, %v302
        %v305 = vsub.s32 4, %v281
        %v306 = vsel %vm221, %v305, %v281
        %v307 = vsel %vm220, %v218, %v304
        %v308 = vsel %vm220, 0, %v306
        %v309 = vcosq.f32.pop %v307
        %v310 = vsinq.f32.pop %v307
        %vm311 = vweird.f32 %v218
        %v312 = vand.u32 %v308, 3
        %vm313 = vcmp.lt.s32.totalorder %v312, 2
        %vm314 = vcmp.eq.s32.totalorder %v312, 0
        %v315 = vxor.u32 %v310, 2147483648
        %v316 = vsel %vm314, %v309, %v315
        %vm317 = vcmp.eq.s32.totalorder %v312, 2
        %v318 = vxor.u32 %v309, 2147483648
        %v319 = vsel %vm317, %v318, %v310
        %v320 = vsel %vm313, %v316, %v319
        %v321 = vsel %vm311, nan, %v320
        %v322 = vand.u32 2147483647, %v218
        %vm323 = vcmp.le.f32.partialorder %v322, 0.7853982
        %vm324 = vcmp.lt.s32.totalorder %v218, 0
        %v325 = vand.u32 %v218, 2139095040
        %v326 = vshrl.u32 %v325, 23
        %v327 = vsub.s32 %v326, 127
        %v328 = vand.u32 2147483647, %v218
        %v329 = vand.u32 %v328, 8388607
        %v330 = vor.u32 %v329, 8388608
        %v331 = vsub.s32 0, %v330
        %v332 = vadd.s32 %v327, 1
        %vm333 = vcmp.gt.s32.totalorder %v332, 0
        %v334 = vsel %vm333, %v332, 0
        %v335 = vshrl.u32 %v334, 5
        %v336 = vand.u32 %v334, 31
        %v337 = vsub.s32 32, %v336
        %v338 = vshrl.u32 683565275, %v337
        %v339 = vshll.u32 683565275, %v336
        %v340 = vshrl.u32 2475754826, %v337
        %v341 = vor.u32 %v339, %v340
        %v342 = vshll.u32 2475754826, %v336
        %v343 = vshrl.u32 2131351028, %v337
        %v344 = vor.u32 %v342, %v343
        %v345 = vshll.u32 2131351028, %v336
        %v346 = vshrl.u32 2102212464, %v337
        %v347 = vor.u32 %v345, %v346
        %v348 = vshll.u32 2102212464, %v336
        %v349 = vshrl.u32 920167782, %v337
        %v350 = vor.u32 %v348, %v349
        %v351 = vshll.u32 920167782, %v336
        %v352 = vshrl.u32 1326507024, %v337
        %v353 = vor.u32 %v351, %v352
        %vm354 = vcmp.lt.s32.totalorder %v335, 1
        %vm355 = vcmp.lt.s32.totalorder %v335, 2
        %vm356 = vcmp.lt.s32.totalorder %v335, 3
        %vm357 = vcmp.lt.s32.totalorder %v335, 4
        %v358 = vsel %vm354, %v338, %v341
        %v359 = vsel %vm357, %v347, 2102212464
        %v360 = vsel %vm356, %v344, %v359
        %v361 = vsel %vm355, %v358, %v360
        %v362 = vsel %vm354, %v341, %v344
        %v363 = vsel %vm357, %v350, 920167782
        %v364 = vsel %vm356, %v347, %v363
        %v365 = vsel %vm355, %v362, %v364
        %v366 = vsel %vm354, %v344, %v347
        %v367 = vsel %vm357, %v353, 1326507024
        %v368 = vsel %vm356, %v350, %v367
        %v369 = vsel %vm355, %v366, %v368
        %v370 = vshll.u32 %v330, 8
        %v371 = vmul.u32.u64.compose %v370, %v369
        %v372 = vextract.low.u32 %v371
        %v373 = vextract.high.u32 %v371
        %v374 = vmul.u32.u64.compose %v370, %v365
        %v375 = vextract.low.u32 %v374
        %v376 = vextract.high.u32 %v374
        %v377 = vmul.u32 %v370, %v361
        %v378 = vadd.s32 %v373, %v375
        %vm379 = vc.u32 %v373, %v375
        %v380 = vadd.s32 %v376, 1
        %v381 = vsel %vm379, %v380, %v376
        %v382 = vadd.s32 %v377, %v381
        %v383 = vadd.s32 %v382, 536870912
        %v384 = vshrl.u32 %v383, 30
        %v385 = vshll.u32 %v384, 30
        %v386 = vsub.s32 %v382, %v385
        %vm387 = vcmp.lt.s32.totalorder %v386, 0
        %v388 = vsub.s32 0, %v386
        %v389 = vsel %vm387, %v388, %v386
        %v390 = vclz %v389
        %v391 = vsub.s32 %v390, 2
        %vm392 = vcmp.gt.s32.totalorder 0, %v391
        %v393 = vsel %vm392, 0, %v391
        %v394 = vsub.s32 32, %v393
        %v395 = vshll.u32 %v386, %v393
        %v396 = vshrl.u32 %v378, %v394
        %v397 = vor.u32 %v395, %v396
        %v398 = vsub.s32 4294967266, %v393
        %v399 = vadd.s32 %v398, 127
        %v400 = vshll.u32 %v399, 23
        %v401 = vor.u32 4788187, %v400
        %v402 = vand.u32 2147483647, %v401
        %v404 = vcvt.s32.f32 %v397
        %v405 = vmul.f32 %v404, %v402
        %v406 = vxor.u32 %v405, 2147483648
        %v407 = vsel %vm324, %v406, %v405
        %v408 = vsub.s32 4, %v384
        %v409 = vsel %vm324, %v408, %v384
        %v410 = vsel %vm323, %v218, %v407
        %v411 = vsel %vm323, 0, %v409
        %v412 = vcosq.f32.pop %v410
        %v413 = vsinq.f32.pop %v410
        %vm414 = vweird.f32 %v218
        %v415 = vadd.s32 %v411, 3
        %v416 = vand.u32 %v415, 3
        %vm417 = vcmp.lt.s32.totalorder %v416, 2
        %vm418 = vcmp.eq.s32.totalorder %v416, 0
        %v419 = vxor.u32 %v413, 2147483648
        %v420 = vsel %vm418, %v412, %v419
        %vm421 = vcmp.eq.s32.totalorder %v416, 2
        %v422 = vxor.u32 %v412, 2147483648
        %v423 = vsel %vm421, %v422, %v413
        %v424 = vsel %vm417, %v420, %v423
        %v425 = vsel %vm414, nan, %v424
        %vm426 = vcmask 130048
        %427 = vst.msk [vmem:[%s189] sm:$0xff] %vm426, %v321
        %428 = vst.msk [vmem:[%s196] sm:$0xff] %vm426, %v425
        %s429 = sand.u32 %s92, 1
        %s430 = scalar_lea.sflag [#allocation3], %s429
        %s431 = sand.u32 %s92, 1
        %s432 = smul.addr %s431, 8
        %s433 = scalar_lea.vmem [#allocation2], %s432
        %s434 = sand.u32 %s120, 1
        %s435 = scalar_lea.sflag [#allocation5], %s434
        %s436 = sand.u32 %s120, 1
        %s437 = smul.addr %s436, 8
        %s438 = scalar_lea.vmem [#allocation4], %s437
        // Predicated region
        $region29: #{tpu_custom_call.1} parent=27 // pred_check
          %p439 = pneg %p102
        $region30: #{tpu_custom_call.1} parent=27 // pred_check_branch
          %441 = sbr.rel (%p439) target = $region32
        $region31: #{tpu_custom_call.1} parent=27 // pred_region
          %s443 = ssub.s32 128, 128
          %444 = vsyncadd %s430, %s443
          %s445 = sadd.s32 %s26, %s25
          %s446 = smul.addr %s445, 128
          %s447 = scalar_lea.hbm %s2, %s446
          %s449 = sshll.u32 %s433, 4
          %s450 = int_to_ptr.vmem [resolvable:$true] %s449
          %452 = dma.vmem_to_hbm [thread:$0]  %s450, 128, %s447, %s430
        $region32: #{tpu_custom_call.1} parent=27 // pred_fallthru
          _
        // Predicated region
        $region33: #{tpu_custom_call.1} parent=27 // pred_check
          %p453 = pneg %p130
        $region34: #{tpu_custom_call.1} parent=27 // pred_check_branch
          %455 = sbr.rel (%p453) target = $region36
        $region35: #{tpu_custom_call.1} parent=27 // pred_region
          %s457 = ssub.s32 128, 128
          %458 = vsyncadd %s435, %s457
          %s459 = sadd.s32 %s26, %s25
          %s460 = smul.addr %s459, 128
          %s461 = scalar_lea.hbm %s3, %s460
          %s463 = sshll.u32 %s438, 4
          %s464 = int_to_ptr.vmem [resolvable:$true] %s463
          %466 = dma.vmem_to_hbm [thread:$0]  %s464, 128, %s461, %s435
        $region36: #{tpu_custom_call.1} parent=27 // pred_fallthru
          _
      $region28: #{tpu_custom_call.1} parent=5 // pred_fallthru
        _
      %p467 = scmp.le.s32.totalorder 2, %s16
      // Predicated region
      $region37: #{tpu_custom_call.1} parent=5 // pred_check
        %p468 = pneg %p467
      $region38: #{tpu_custom_call.1} parent=5 // pred_check_branch
        %470 = sbr.rel (%p468) target = $region40
      $region39: #{tpu_custom_call.1} parent=5 // pred_region
        %s471 = ssub.s32 %s16, 2
        // Predicated region
        $region41: #{tpu_custom_call.1} parent=39 // pred_check
          %p472 = pneg %p108
        $region42: #{tpu_custom_call.1} parent=39 // pred_check_branch
          %474 = sbr.rel (%p472) target = $region44
        $region43: #{tpu_custom_call.1} parent=39 // pred_region
          %s475 = sand.u32 %s93, 1
          %s476 = scalar_lea.sflag [#allocation3], %s475
          %s477 = sand.u32 %s93, 1
          %s478 = smul.addr %s477, 8
          %s479 = scalar_lea.vmem [#allocation2], %s478
          %480 = dma.done %s476, 128
        $region44: #{tpu_custom_call.1} parent=39 // pred_fallthru
          _
        // Predicated region
        $region45: #{tpu_custom_call.1} parent=39 // pred_check
          %p481 = pneg %p136
        $region46: #{tpu_custom_call.1} parent=39 // pred_check_branch
          %483 = sbr.rel (%p481) target = $region48
        $region47: #{tpu_custom_call.1} parent=39 // pred_region
          %s484 = sand.u32 %s121, 1
          %s485 = scalar_lea.sflag [#allocation5], %s484
          %s486 = sand.u32 %s121, 1
          %s487 = smul.addr %s486, 8
          %s488 = scalar_lea.vmem [#allocation4], %s487
          %489 = dma.done %s485, 128
        $region48: #{tpu_custom_call.1} parent=39 // pred_fallthru
          _
      $region40: #{tpu_custom_call.1} parent=5 // pred_fallthru
        _
    $region6: #{tpu_custom_call.1} parent=1 // loop_footer
      %s20 = sadd.s32 1, %s16
    $region7: #{tpu_custom_call.1} parent=1 // loop_footer_branch
      %15 = sbr.rel target = $region3
    $region8: #{tpu_custom_call.1} parent=1 // loop_exit
      _
    %490 = vsyncpa [#allocation3], 1
    %s491 = scalar_lea.sflag [#allocation3], 1
    %492 = vsyncpa %s491, 1
    %493 = vsyncpa [#allocation5], 1
    %s494 = scalar_lea.sflag [#allocation5], 1
    %495 = vsyncpa %s494, 1

</llo_original>
